<compile_context>
chip_gen: v5e
topology: v5e:2x2
jax: 0.10.0
libtpu: 0.0.40
codegen_flags: <defaults>
</compile_context>

<pallas_src>
import jax
import jax.numpy as jnp
from jax.experimental import pallas as pl
from jax.experimental.pallas import tpu as pltpu


_LANE = 128
_TILE_BYTES = 2 * 1024 * 1024     # ~2 MiB per tile (double-buffered by Pallas)
_VMEM_LIMIT = 48 * 1024 * 1024    # headroom; safe on v5e/v6e (128 MiB) and v7x (64 MiB)


def _sublane(dtype) -> int:
    # Packed sublane multiple: 8 for 32-bit, 16 for 16-bit, 32 for 8-bit.
    return max(8, 32 // jnp.dtype(dtype).itemsize)


def _add_rows_kernel(x_ref, pos_ref, o_ref):
    # Lane-dense path: x_ref/o_ref: (tB, tC); pos_ref: (1, tC).
    # Positional row is broadcast over the sublane (batch-row) axis.
    o_ref[...] = x_ref[...] + pos_ref[...]


def _add_seq_kernel(x_ref, pos_ref, o_ref):
    # Fallback path: batch dim squeezed out; x_ref/o_ref/pos_ref: (tS, E).
    o_ref[...] = x_ref[...] + pos_ref[...]


def position_embedding_forward(input_embeddings: jax.Array,
                               embedding_table: jax.Array) -> jax.Array:
    """out[b, s, :] = input_embeddings[b, s, :] + embedding_table[s, :]."""
    B, S, E = input_embeddings.shape
    max_S, E_tab = embedding_table.shape
    assert S <= max_S, "sequence longer than max_sequence_length"
    assert E == E_tab

    dtype = input_embeddings.dtype
    itemsize = jnp.dtype(dtype).itemsize

    # positions = arange(S) -> static slice of the table; cast to activation
    # dtype in the wrapper so the kernel add/store never mixes dtypes.
    pos = embedding_table[:S].astype(dtype)  # [S, E]

    P = S * E
    if P % _LANE == 0:
        # ---------- lane-dense path: view activations as [B, S*E] ----------
        x2 = input_embeddings.reshape(B, P)    # contiguous, free reshape
        pos2 = pos.reshape(1, P)

        # Row (sublane) tile: full batch if small, else a 256-row tile.
        tB = B if B <= 256 else 256            # 256 is a multiple of 8/16/32
        # Column (lane) tile: multiple of 128, sized so a tile is ~_TILE_BYTES.
        tC = _TILE_BYTES // max(1, tB * itemsize)
        tC = max(_LANE, (tC // _LANE) * _LANE)
        tC = min(tC, P)

        grid = (pl.cdiv(B, tB), pl.cdiv(P, tC))
        out2 = pl.pallas_call(
            _add_rows_kernel,
            out_shape=jax.ShapeDtypeStruct((B, P), dtype),
            grid_spec=pltpu.PrefetchScalarGridSpec(
                num_scalar_prefetch=0,
                grid=grid,
                in_specs=[
                    pl.BlockSpec((tB, tC), lambda i, j: (i, j)),
                    pl.BlockSpec((1, tC), lambda i, j: (0, j)),
                ],
                out_specs=pl.BlockSpec((tB, tC), lambda i, j: (i, j)),
            ),
            compiler_params=pltpu.CompilerParams(
                dimension_semantics=("parallel", "parallel"),
                vmem_limit_bytes=_VMEM_LIMIT),
        )(x2, pos2)
        return out2.reshape(B, S, E)

    # ---------- fallback path (S*E not a multiple of 128) ----------
    sub = _sublane(dtype)
    rows_per_tile = max(1, _TILE_BYTES // max(1, E * itemsize))
    if S <= rows_per_tile:
        tS = S
    else:
        tS = max(sub, (rows_per_tile // sub) * sub)

    grid = (B, pl.cdiv(S, tS))
    out = pl.pallas_call(
        _add_seq_kernel,
        out_shape=jax.ShapeDtypeStruct((B, S, E), dtype),
        grid_spec=pltpu.PrefetchScalarGridSpec(
            num_scalar_prefetch=0,
            grid=grid,
            in_specs=[
                pl.BlockSpec((None, tS, E), lambda b, s: (b, s, 0)),  # batch squeezed
                pl.BlockSpec((tS, E), lambda b, s: (s, 0)),
            ],
            out_specs=pl.BlockSpec((None, tS, E), lambda b, s: (b, s, 0)),
        ),
        compiler_params=pltpu.CompilerParams(
            dimension_semantics=("parallel", "parallel"),
            vmem_limit_bytes=_VMEM_LIMIT),
    )(input_embeddings, pos)
    return out


if __name__ == "__main__":
    # Small deterministic setup consistent with the module.
    max_sequence_length = 16
    emb_dim = 32
    batch = 2
    seq = 8

    key = jax.random.PRNGKey(0)
    k_table, k_x, k_x2, k_t2 = jax.random.split(key, 4)

    # nn.Embedding default init: N(0, 1)
    embedding_table = jax.random.normal(
        k_table, (max_sequence_length, emb_dim), dtype=jnp.float32)
    input_embeddings = jax.random.normal(
        k_x, (batch, seq, emb_dim), dtype=jnp.float32)

    # 1) main (lane-dense) path, f32
    out = position_embedding_forward(input_embeddings, embedding_table)
    out = jax.block_until_ready(out)
    ref = input_embeddings + embedding_table[:seq][None, :, :]
    assert out.shape == (batch, seq, emb_dim)
    assert jnp.allclose(out, ref, atol=1e-6, rtol=1e-6), "f32 mismatch vs reference"

    # 2) lane-dense path with bf16 activations + f32 table (wrapper cast)
    x_bf16 = input_embeddings.astype(jnp.bfloat16)
    out_bf16 = jax.block_until_ready(
        position_embedding_forward(x_bf16, embedding_table))
    ref_bf16 = x_bf16 + embedding_table[:seq].astype(jnp.bfloat16)[None, :, :]
    assert out_bf16.dtype == jnp.bfloat16
    assert jnp.allclose(out_bf16.astype(jnp.float32),
                        ref_bf16.astype(jnp.float32), atol=1e-2), "bf16 mismatch"

    # 3) fallback path: S*E not a multiple of 128
    B2, S2, E2 = 3, 7, 20
    table2 = jax.random.normal(k_t2, (max_sequence_length, E2), dtype=jnp.float32)
    x2 = jax.random.normal(k_x2, (B2, S2, E2), dtype=jnp.float32)
    out2 = jax.block_until_ready(position_embedding_forward(x2, table2))
    ref2 = x2 + table2[:S2][None, :, :]
    assert jnp.allclose(out2, ref2, atol=1e-6, rtol=1e-6), "fallback mismatch"

    print("KERNEL_OK")
</pallas_src>

<mosaic_0001>
module attributes {stable_mosaic.version = 11 : i64} {
  func.func @_add_rows_kernel(%arg0: i32, %arg1: i32, %arg2: memref<2x256xf32, #tpu.memory_space<vmem>>, %arg3: memref<1x256xf32, #tpu.memory_space<vmem>>, %arg4: memref<2x256xf32, #tpu.memory_space<vmem>>) attributes {dimension_semantics = [#tpu.dimension_semantics<parallel>, #tpu.dimension_semantics<parallel>], iteration_bounds = array<i64: 1, 1>, scalar_prefetch = 0 : i64, scratch_operands = 0 : i64, tpu.core_type = #tpu.core_type<tc>, window_params = [{transform_indices = @transform_0, window_bounds = array<i64: 2, 256>}, {transform_indices = @transform_1, window_bounds = array<i64: 1, 256>}, {transform_indices = @transform_2, window_bounds = array<i64: 2, 256>}]} {
    %c0 = arith.constant 0 : index
    %c0_0 = arith.constant 0 : index
    %0 = vector.load %arg2[%c0, %c0_0] : memref<2x256xf32, #tpu.memory_space<vmem>>, vector<2x256xf32>
    %c0_1 = arith.constant 0 : index
    %c0_2 = arith.constant 0 : index
    %1 = vector.load %arg3[%c0_1, %c0_2] : memref<1x256xf32, #tpu.memory_space<vmem>>, vector<1x256xf32>
    %2 = vector.broadcast %1 : vector<1x256xf32> to vector<2x256xf32>
    %3 = arith.addf %0, %2 : vector<2x256xf32>
    %c0_3 = arith.constant 0 : index
    %c0_4 = arith.constant 0 : index
    %4 = vector.load %arg4[%c0_3, %c0_4] : memref<2x256xf32, #tpu.memory_space<vmem>>, vector<2x256xf32>
    tpu.vector_store %arg4[%c0_3, %c0_4], %3 {strides = array<i32>} : memref<2x256xf32, #tpu.memory_space<vmem>>, vector<2x256xf32>,
    return
  }
  func.func @transform_0(%arg0: i32, %arg1: i32) -> (i32, i32) {
    %c0_i32 = arith.constant 0 : i32
    return %arg0, %arg1 : i32, i32
  }
  func.func @transform_1(%arg0: i32, %arg1: i32) -> (i32, i32) {
    %c0_i32 = arith.constant 0 : i32
    %c0_i32_0 = arith.constant 0 : i32
    return %c0_i32, %arg1 : i32, i32
  }
  func.func @transform_2(%arg0: i32, %arg1: i32) -> (i32, i32) {
    %c0_i32 = arith.constant 0 : i32
    return %arg0, %arg1 : i32, i32
  }
}

</mosaic_0001>

<llo_original>
// kernel: tpu_custom_call.1
$region0: #{tpu_custom_call.1}
  #allocation0 [shape = 'u32[]', space=smem, size = 0x4, offset = 0x4, fixed_abs, tag = 'smem constant byte address 0x4 - core index']
  #allocation1 [shape = 'u32[72,128]{1,0:T(1,128)}', space=vmem, size = 0x9000, scoped, tag = 'internal scratch']
  %s0 = inlined_call_operand.hbm [shape: f32[2,256], index: 0, kind: input, shape index: {}]
  %s1 = inlined_call_operand.hbm [shape: f32[1,256], index: 1, kind: input, shape index: {}]
  %s2 = inlined_call_operand.hbm [shape: f32[2,256], index: 2, kind: output, shape index: {}]
  %s3 = sld [smem:[#allocation0]]
  $region26: #{tpu_custom_call.1} parent=0
    _
  %s5 = ssub.s32 1, %s3
  %s6 = scalar_select 0, %s5, %s3
  $region1: #{tpu_custom_call.1} parent=0
    #allocation2 [shape = 'u8[2048]{0}', space=vmem, size = 0x800, scoped, tag = 'input window, operand 0, single buffered']
    #allocation3 [shape = 's32[1]{0}', space=sflag, size = 0x4, scoped, tag = 'scoped memory for tpu_custom_call.1']
    #allocation4 [shape = 's32[1]{0}', space=sflag, size = 0x4, scoped, tag = 'scoped memory for tpu_custom_call.1']
    #allocation5 [shape = 'u8[1024]{0}', space=vmem, size = 0x400, scoped, tag = 'input window, operand 1, single buffered']
    #allocation6 [shape = 's32[1]{0}', space=sflag, size = 0x4, scoped, tag = 'scoped memory for tpu_custom_call.1']
    #allocation7 [shape = 'u8[2048]{0}', space=vmem, size = 0x800, scoped, tag = 'output window, operand 0, single buffered']
    %7 = vsyncpa [#allocation3], 0
    %8 = vsyncpa [#allocation6], 0
    %9 = vsyncpa [#allocation4], 0
    // Predicated region
    $region2: #{tpu_custom_call.1} parent=1 // pred_check
      _
    $region3: #{tpu_custom_call.1} parent=1 // pred_check_branch
      %11 = sbr.rel (0) target = $region5
    $region4: #{tpu_custom_call.1} parent=1 // pred_region
      %13 = vsyncadd [#allocation3], 0
      %s15 = sshll.u32 %s0, 4
      %s16 = int_to_ptr.hbm [resolvable:$true] %s15
      %s17 = sshll.u32 [#allocation2], 4
      %s18 = int_to_ptr.vmem [resolvable:$true] %s17
      %20 = dma.hbm_to_vmem [thread:$0]  %s16, 64, %s18, [#allocation3]
    $region5: #{tpu_custom_call.1} parent=1 // pred_fallthru
      _
    // Predicated region
    $region6: #{tpu_custom_call.1} parent=1 // pred_check
      _
    $region7: #{tpu_custom_call.1} parent=1 // pred_check_branch
      %22 = sbr.rel (0) target = $region9
    $region8: #{tpu_custom_call.1} parent=1 // pred_region
      %24 = vsyncadd [#allocation6], 0
      %s26 = sshll.u32 %s1, 4
      %s27 = int_to_ptr.hbm [resolvable:$true] %s26
      %s28 = sshll.u32 [#allocation5], 4
      %s29 = int_to_ptr.vmem [resolvable:$true] %s28
      %31 = dma.hbm_to_vmem [thread:$0]  %s27, 32, %s29, [#allocation6]
    $region9: #{tpu_custom_call.1} parent=1 // pred_fallthru
      _
    // Predicated region
    $region10: #{tpu_custom_call.1} parent=1 // pred_check
      _
    $region11: #{tpu_custom_call.1} parent=1 // pred_check_branch
      %33 = sbr.rel (0) target = $region13
    $region12: #{tpu_custom_call.1} parent=1 // pred_region
      %35 = dma.done [#allocation3], 64
    $region13: #{tpu_custom_call.1} parent=1 // pred_fallthru
      _
    // Predicated region
    $region14: #{tpu_custom_call.1} parent=1 // pred_check
      _
    $region15: #{tpu_custom_call.1} parent=1 // pred_check_branch
      %37 = sbr.rel (0) target = $region17
    $region16: #{tpu_custom_call.1} parent=1 // pred_region
      %39 = dma.done [#allocation6], 32
    $region17: #{tpu_custom_call.1} parent=1 // pred_fallthru
      _
    %v40 = vld [vmem:[#allocation2] sm:$0xf]
    %v41 = vld [vmem:[#allocation5] sm:$0x3]
    %v43 = vperm.slane %v41, 0
    %v44 = vperm.slane %v41, 1
    %v45 = vrot.slane %v44, 6
    %vm46 = vcmask 1041408
    %v47 = vsel %vm46, %v43, %v45
    %v49 = vadd.f32 %v40, %v47
    %50 = vst [vmem:[#allocation7] sm:$0xf] %v49
    // Predicated region
    $region18: #{tpu_custom_call.1} parent=1 // pred_check
      _
    $region19: #{tpu_custom_call.1} parent=1 // pred_check_branch
      %52 = sbr.rel (0) target = $region21
    $region20: #{tpu_custom_call.1} parent=1 // pred_region
      %54 = vsyncadd [#allocation4], 0
      %s56 = sshll.u32 [#allocation7], 4
      %s57 = int_to_ptr.vmem [resolvable:$true] %s56
      %s58 = sshll.u32 %s2, 4
      %s59 = int_to_ptr.hbm [resolvable:$true] %s58
      %61 = dma.vmem_to_hbm [thread:$0]  %s57, 64, %s59, [#allocation4]
    $region21: #{tpu_custom_call.1} parent=1 // pred_fallthru
      _
    // Predicated region
    $region22: #{tpu_custom_call.1} parent=1 // pred_check
      _
    $region23: #{tpu_custom_call.1} parent=1 // pred_check_branch
      %63 = sbr.rel (0) target = $region25
    $region24: #{tpu_custom_call.1} parent=1 // pred_region
      %65 = dma.done [#allocation4], 64
    $region25: #{tpu_custom_call.1} parent=1 // pred_fallthru
      _
    %66 = vsyncpa [#allocation3], 1
    %67 = vsyncpa [#allocation6], 1
    %68 = vsyncpa [#allocation4], 1

</llo_original>
